<compile_context>
chip_gen: v5e
topology: v5e:2x2
jax: 0.10.0
libtpu: 0.0.40
codegen_flags: <defaults>
</compile_context>

<pallas_src>
import jax
import jax.numpy as jnp
from jax.experimental import pallas as pl
from jax.experimental.pallas import tpu as pltpu


def _t5_attn_head_kernel(x_ref, mask_ref, bias_ref, wq_ref, wk_ref, wv_ref,
                         wo_ref, ln_ref, o_ref, xn_ref, acc_ref):
    """One (batch, head) grid step of the T5 self-attention sublayer."""
    h = pl.program_id(1)

    @pl.when(h == 0)
    def _init():
        x = x_ref[0].astype(jnp.float32)                      # (S, D)
        # T5 LayerNorm == RMSNorm (no mean subtraction, no bias), in f32.
        var = jnp.mean(x * x, axis=-1, keepdims=True)
        xn = x * jax.lax.rsqrt(var + 1e-6) * ln_ref[...]
        xn_ref[...] = xn.astype(jnp.bfloat16)                 # reused by all heads
        acc_ref[...] = x                                      # residual seed

    xn = xn_ref[...]                                          # (S, D) bf16

    # Per-head projections: bf16 MXU inputs, f32 accumulation.
    q = jnp.dot(xn, wq_ref[0],
                preferred_element_type=jnp.float32).astype(jnp.bfloat16)
    k = jnp.dot(xn, wk_ref[0],
                preferred_element_type=jnp.float32).astype(jnp.bfloat16)
    v = jnp.dot(xn, wv_ref[0],
                preferred_element_type=jnp.float32).astype(jnp.bfloat16)

    # T5 attention: no 1/sqrt(d) scaling; logits += position_bias + mask (f32).
    scores = jax.lax.dot_general(q, k, (((1,), (1,)), ((), ())),
                                 preferred_element_type=jnp.float32)  # (S, S)
    scores = scores + bias_ref[0, 0].astype(jnp.float32) + mask_ref[0]

    m = jnp.max(scores, axis=-1, keepdims=True)
    p = jnp.exp(scores - m)
    p = p * pl.reciprocal(jnp.sum(p, axis=-1, keepdims=True), approx=True)

    attn = jnp.dot(p.astype(jnp.bfloat16), v,
                   preferred_element_type=jnp.float32)                # (S, dh)
    acc_ref[...] += jnp.dot(attn.astype(jnp.bfloat16), wo_ref[0],
                            preferred_element_type=jnp.float32)       # (S, D)

    @pl.when(h == pl.num_programs(1) - 1)
    def _store():
        o_ref[0] = acc_ref[...].astype(o_ref.dtype)


def t5_attention_block(hidden_states, attention_mask, position_bias, params):
    """Pallas forward of the wrapped module. Returns (hidden_states, position_bias)."""
    B, S, D = hidden_states.shape
    H = position_bias.shape[1]
    dh = D // H
    wq, wk, wv, wo, ln_w = params

    # Host-side (load-time) weight plumbing: head-major layout, bf16 for MXU.
    to_bf16 = lambda a: a.astype(jnp.bfloat16)
    wq_h = to_bf16(wq.reshape(D, H, dh).transpose(1, 0, 2))   # (H, D, dh)
    wk_h = to_bf16(wk.reshape(D, H, dh).transpose(1, 0, 2))   # (H, D, dh)
    wv_h = to_bf16(wv.reshape(D, H, dh).transpose(1, 0, 2))   # (H, D, dh)
    wo_h = to_bf16(wo.reshape(H, dh, D))                      # (H, dh, D)
    bias_bf16 = to_bf16(position_bias)
    bias_batched = position_bias.shape[0] != 1

    def bias_map(b, h):
        # Standard T5 relative bias is batch-broadcast: DMA it once, not per b.
        return (b if bias_batched else 0, h, 0, 0)

    # VMEM budget: double-buffered inputs + output + persistent scratch, 2x headroom.
    per_step = (S * D * 4 + S * 4 + S * S * 2 + 3 * D * dh * 2 + dh * D * 2
                + D * 4 + S * D * 4)
    scratch_bytes = S * D * 2 + S * D * 4
    vmem_limit = int(min(100 * 2 ** 20,
                         max(2 * (2 * per_step + scratch_bytes), 32 * 2 ** 20)))

    out = pl.pallas_call(
        _t5_attn_head_kernel,
        out_shape=jax.ShapeDtypeStruct((B, S, D), hidden_states.dtype),
        grid_spec=pltpu.PrefetchScalarGridSpec(
            num_scalar_prefetch=0,
            grid=(B, H),
            in_specs=[
                pl.BlockSpec((1, S, D), lambda b, h: (b, 0, 0)),      # hidden_states
                pl.BlockSpec((1, 1, S), lambda b, h: (b, 0, 0)),      # attention_mask
                pl.BlockSpec((1, 1, S, S), bias_map),                 # position_bias (per head)
                pl.BlockSpec((1, D, dh), lambda b, h: (h, 0, 0)),     # Wq head slice
                pl.BlockSpec((1, D, dh), lambda b, h: (h, 0, 0)),     # Wk head slice
                pl.BlockSpec((1, D, dh), lambda b, h: (h, 0, 0)),     # Wv head slice
                pl.BlockSpec((1, dh, D), lambda b, h: (h, 0, 0)),     # Wo head slice
                pl.BlockSpec((1, D), lambda b, h: (0, 0)),            # RMSNorm weight
            ],
            out_specs=pl.BlockSpec((1, S, D), lambda b, h: (b, 0, 0)),
            scratch_shapes=[
                pltpu.VMEM((S, D), jnp.bfloat16),   # normalized input, reused per head
                pltpu.VMEM((S, D), jnp.float32),    # residual + Wo accumulator
            ],
        ),
        compiler_params=pltpu.CompilerParams(
            dimension_semantics=("parallel", "arbitrary"),
            vmem_limit_bytes=vmem_limit,
        ),
    )(hidden_states, attention_mask, bias_bf16, wq_h, wk_h, wv_h, wo_h, ln_w)
    return out, position_bias


class CheckpointWrapper:
    """JAX analog of the PyTorch CheckpointWrapper.

    The torch version swaps None outputs for empty tensors purely so
    torch.utils.checkpoint can handle them; jax.checkpoint handles pytrees
    natively, so no bookkeeping is required here.
    """
    # TODO(synk): the None->empty-tensor substitution is torch-checkpoint glue
    # with no Pallas/JAX equivalent; jax.checkpoint handles pytrees natively.

    def __init__(self, module_fn, use_checkpoint=False, training=False):
        self.module_fn = module_fn
        self.use_checkpoint = use_checkpoint
        self.training = training

    def __call__(self, hidden_states, attention_mask, position_bias, **kwargs):
        if self.use_checkpoint and self.training:
            fn = jax.checkpoint(
                lambda h, m, p: self.module_fn(h, m, p, **kwargs))
            return fn(hidden_states, attention_mask, position_bias)
        return self.module_fn(hidden_states, attention_mask, position_bias, **kwargs)


def _reference(hidden_states, attention_mask, position_bias, params):
    """Pure-JAX reference mirroring the kernel's mixed-precision policy
    (bf16 matmul inputs, f32 accumulation / softmax / mask / residual)."""
    wq, wk, wv, wo, ln_w = params
    x = hidden_states.astype(jnp.float32)
    B, S, D = x.shape
    H = position_bias.shape[1]
    dh = D // H

    var = jnp.mean(x * x, axis=-1, keepdims=True)
    xn = (x * jax.lax.rsqrt(var + 1e-6) * ln_w[0]).astype(jnp.bfloat16)
    wq_b, wk_b, wv_b, wo_b = (w.astype(jnp.bfloat16) for w in (wq, wk, wv, wo))

    def heads(t):  # (B,S,D) -> (B,H,S,dh)
        return t.reshape(B, S, H, dh).transpose(0, 2, 1, 3)

    q = heads(jnp.dot(xn, wq_b, preferred_element_type=jnp.float32)).astype(jnp.bfloat16)
    k = heads(jnp.dot(xn, wk_b, preferred_element_type=jnp.float32)).astype(jnp.bfloat16)
    v = heads(jnp.dot(xn, wv_b, preferred_element_type=jnp.float32)).astype(jnp.bfloat16)

    bias = position_bias.astype(jnp.bfloat16).astype(jnp.float32)
    scores = jnp.einsum("bhqd,bhkd->bhqk", q, k,
                        preferred_element_type=jnp.float32)
    scores = scores + bias + attention_mask[:, :, None, :]
    p = jax.nn.softmax(scores, axis=-1).astype(jnp.bfloat16)
    attn = jnp.einsum("bhqk,bhkd->bhqd", p, v,
                      preferred_element_type=jnp.float32)
    attn = attn.transpose(0, 2, 1, 3).reshape(B, S, D).astype(jnp.bfloat16)
    out = x + jnp.dot(attn, wo_b, preferred_element_type=jnp.float32)
    return out, position_bias


if __name__ == "__main__":
    # Small but layout-friendly shapes: D is a lane-dense multiple of 128,
    # S is a multiple of 8, so output stores are unmasked vst.
    B, S, D, H = 2, 16, 128, 4

    key = jax.random.PRNGKey(0)
    k_h, k_b, k_q, k_k, k_v, k_o = jax.random.split(key, 6)

    hidden_states = jax.random.normal(k_h, (B, S, D), dtype=jnp.float32)
    # boolean validity mask -> additive mask (last 2 tokens of batch 1 padded)
    valid = jnp.ones((B, S), dtype=jnp.float32).at[1, -2:].set(0.0)
    attention_mask = ((1.0 - valid) * -1e9).reshape(B, 1, S)
    # standard T5 relative bias is batch-broadcast -> shape (1, H, S, S)
    position_bias = 0.1 * jax.random.normal(k_b, (1, H, S, S), dtype=jnp.float32)

    params = (
        0.05 * jax.random.normal(k_q, (D, D), dtype=jnp.float32),
        0.05 * jax.random.normal(k_k, (D, D), dtype=jnp.float32),
        0.05 * jax.random.normal(k_v, (D, D), dtype=jnp.float32),
        0.05 * jax.random.normal(k_o, (D, D), dtype=jnp.float32),
        jnp.ones((1, D), dtype=jnp.float32),
    )

    wrapper = CheckpointWrapper(
        lambda h, m, p: t5_attention_block(h, m, p, params),
        use_checkpoint=False, training=False)

    out_hidden, out_bias = wrapper(hidden_states, attention_mask, position_bias)
    jax.block_until_ready(out_hidden)

    ref_hidden, _ = _reference(hidden_states, attention_mask, position_bias, params)
    # Tolerance covers the approximate softmax reciprocal and MXU accumulation
    # order; the reference already mirrors the bf16 matmul-input policy.
    assert jnp.allclose(out_hidden, ref_hidden, atol=1e-2, rtol=1e-2), "mismatch vs reference"
    assert out_hidden.shape == (B, S, D) and out_bias.shape == (1, H, S, S)

    print("KERNEL_OK")
</pallas_src>

<mosaic_0001>
module attributes {stable_mosaic.version = 11 : i64} {
  func.func @_t5_attn_head_kernel(%arg0: i32, %arg1: i32, %arg2: memref<1x16x128xf32, #tpu.memory_space<vmem>>, %arg3: memref<1x1x16xf32, #tpu.memory_space<vmem>>, %arg4: memref<1x1x16x16xbf16, #tpu.memory_space<vmem>>, %arg5: memref<1x128x32xbf16, #tpu.memory_space<vmem>>, %arg6: memref<1x128x32xbf16, #tpu.memory_space<vmem>>, %arg7: memref<1x128x32xbf16, #tpu.memory_space<vmem>>, %arg8: memref<1x32x128xbf16, #tpu.memory_space<vmem>>, %arg9: memref<1x128xf32, #tpu.memory_space<vmem>>, %arg10: memref<1x16x128xf32, #tpu.memory_space<vmem>>, %arg11: memref<16x128xbf16, #tpu.memory_space<vmem>>, %arg12: memref<16x128xf32, #tpu.memory_space<vmem>>) attributes {dimension_semantics = [#tpu.dimension_semantics<parallel>, #tpu.dimension_semantics<arbitrary>], iteration_bounds = array<i64: 2, 4>, scalar_prefetch = 0 : i64, scratch_operands = 2 : i64, tpu.core_type = #tpu.core_type<tc>, window_params = [{transform_indices = @transform_0, window_bounds = array<i64: 1, 16, 128>}, {transform_indices = @transform_1, window_bounds = array<i64: 1, 1, 16>}, {transform_indices = @transform_2, window_bounds = array<i64: 1, 1, 16, 16>}, {transform_indices = @transform_3, window_bounds = array<i64: 1, 128, 32>}, {transform_indices = @transform_4, window_bounds = array<i64: 1, 128, 32>}, {transform_indices = @transform_5, window_bounds = array<i64: 1, 128, 32>}, {transform_indices = @transform_6, window_bounds = array<i64: 1, 32, 128>}, {pipeline_mode = #tpu.pipeline_mode<synchronous>, transform_indices = @transform_7, window_bounds = array<i64: 1, 128>}, {transform_indices = @transform_8, window_bounds = array<i64: 1, 16, 128>}]} {
    %c0_i32 = arith.constant 0 : i32
    %0 = arith.cmpi eq, %arg1, %c0_i32 : i32
    %1 = arith.extui %0 : i1 to i32
    %c0_i32_0 = arith.constant 0 : i32
    %2 = arith.cmpi ne, %1, %c0_i32_0 : i32
    scf.if %2 {
      %c0_33 = arith.constant 0 : index
      %c0_34 = arith.constant 0 : index
      %c0_35 = arith.constant 0 : index
      %47 = vector.load %arg2[%c0_33, %c0_34, %c0_35] : memref<1x16x128xf32, #tpu.memory_space<vmem>>, vector<1x16x128xf32>
      %48 = vector.shape_cast %47 : vector<1x16x128xf32> to vector<16x128xf32>
      %49 = arith.mulf %48, %48 : vector<16x128xf32>
      %cst_36 = arith.constant dense<0.000000e+00> : vector<16xf32>
      %50 = vector.multi_reduction <add>, %49, %cst_36 [1] : vector<16x128xf32> to vector<16xf32>
      %51 = vector.shape_cast %50 : vector<16xf32> to vector<16x1xf32>
      %cst_37 = arith.constant 1.280000e+02 : f32
      %52 = vector.broadcast %cst_37 : f32 to vector<16x1xf32>
      %53 = arith.divf %51, %52 : vector<16x1xf32>
      %cst_38 = arith.constant 9.99999997E-7 : f32
      %54 = vector.broadcast %cst_38 : f32 to vector<16x1xf32>
      %55 = arith.addf %53, %54 : vector<16x1xf32>
      %56 = math.rsqrt %55 : vector<16x1xf32>
      %57 = vector.broadcast %56 : vector<16x1xf32> to vector<16x128xf32>
      %58 = arith.mulf %48, %57 : vector<16x128xf32>
      %c0_39 = arith.constant 0 : index
      %c0_40 = arith.constant 0 : index
      %59 = vector.load %arg9[%c0_39, %c0_40] : memref<1x128xf32, #tpu.memory_space<vmem>>, vector<1x128xf32>
      %60 = vector.broadcast %59 : vector<1x128xf32> to vector<16x128xf32>
      %61 = arith.mulf %58, %60 : vector<16x128xf32>
      %62 = arith.truncf %61 : vector<16x128xf32> to vector<16x128xbf16>
      %c0_41 = arith.constant 0 : index
      %c0_42 = arith.constant 0 : index
      %63 = vector.load %arg11[%c0_41, %c0_42] : memref<16x128xbf16, #tpu.memory_space<vmem>>, vector<16x128xbf16>
      tpu.vector_store %arg11[%c0_41, %c0_42], %62 {strides = array<i32>} : memref<16x128xbf16, #tpu.memory_space<vmem>>, vector<16x128xbf16>,
      %c0_43 = arith.constant 0 : index
      %c0_44 = arith.constant 0 : index
      %64 = vector.load %arg12[%c0_43, %c0_44] : memref<16x128xf32, #tpu.memory_space<vmem>>, vector<16x128xf32>
      tpu.vector_store %arg12[%c0_43, %c0_44], %48 {strides = array<i32>} : memref<16x128xf32, #tpu.memory_space<vmem>>, vector<16x128xf32>,
    } else {
    }
    %c0 = arith.constant 0 : index
    %c0_1 = arith.constant 0 : index
    %3 = vector.load %arg11[%c0, %c0_1] : memref<16x128xbf16, #tpu.memory_space<vmem>>, vector<16x128xbf16>
    %c0_2 = arith.constant 0 : index
    %c0_3 = arith.constant 0 : index
    %c0_4 = arith.constant 0 : index
    %4 = vector.load %arg5[%c0_2, %c0_3, %c0_4] : memref<1x128x32xbf16, #tpu.memory_space<vmem>>, vector<1x128x32xbf16>
    %5 = vector.shape_cast %4 : vector<1x128x32xbf16> to vector<128x32xbf16>
    %cst = arith.constant dense<0.000000e+00> : vector<16x32xf32>
    %6 = tpu.matmul %3, %5, %cst {dimension_numbers = #tpu.dot_dimension_numbers<[1], [0], [0], [1], [0, 0, 1, 1], [], []>} : vector<16x128xbf16>, vector<128x32xbf16>, vector<16x32xf32> -> vector<16x32xf32>
    %7 = arith.truncf %6 : vector<16x32xf32> to vector<16x32xbf16>
    %c0_5 = arith.constant 0 : index
    %c0_6 = arith.constant 0 : index
    %c0_7 = arith.constant 0 : index
    %8 = vector.load %arg6[%c0_5, %c0_6, %c0_7] : memref<1x128x32xbf16, #tpu.memory_space<vmem>>, vector<1x128x32xbf16>
    %9 = vector.shape_cast %8 : vector<1x128x32xbf16> to vector<128x32xbf16>
    %cst_8 = arith.constant dense<0.000000e+00> : vector<16x32xf32>
    %10 = tpu.matmul %3, %9, %cst_8 {dimension_numbers = #tpu.dot_dimension_numbers<[1], [0], [0], [1], [0, 0, 1, 1], [], []>} : vector<16x128xbf16>, vector<128x32xbf16>, vector<16x32xf32> -> vector<16x32xf32>
    %11 = arith.truncf %10 : vector<16x32xf32> to vector<16x32xbf16>
    %c0_9 = arith.constant 0 : index
    %c0_10 = arith.constant 0 : index
    %c0_11 = arith.constant 0 : index
    %12 = vector.load %arg7[%c0_9, %c0_10, %c0_11] : memref<1x128x32xbf16, #tpu.memory_space<vmem>>, vector<1x128x32xbf16>
    %13 = vector.shape_cast %12 : vector<1x128x32xbf16> to vector<128x32xbf16>
    %cst_12 = arith.constant dense<0.000000e+00> : vector<16x32xf32>
    %14 = tpu.matmul %3, %13, %cst_12 {dimension_numbers = #tpu.dot_dimension_numbers<[1], [0], [0], [1], [0, 0, 1, 1], [], []>} : vector<16x128xbf16>, vector<128x32xbf16>, vector<16x32xf32> -> vector<16x32xf32>
    %15 = arith.truncf %14 : vector<16x32xf32> to vector<16x32xbf16>
    %cst_13 = arith.constant dense<0.000000e+00> : vector<16x16xf32>
    %16 = tpu.matmul %7, %11, %cst_13 {dimension_numbers = #tpu.dot_dimension_numbers<[1], [1], [0], [0], [0, 0, 1, 0], [], []>} : vector<16x32xbf16>, vector<16x32xbf16>, vector<16x16xf32> -> vector<16x16xf32>
    %c0_14 = arith.constant 0 : index
    %c0_15 = arith.constant 0 : index
    %c0_16 = arith.constant 0 : index
    %c0_17 = arith.constant 0 : index
    %17 = vector.load %arg4[%c0_14, %c0_15, %c0_16, %c0_17] : memref<1x1x16x16xbf16, #tpu.memory_space<vmem>>, vector<1x1x16x16xbf16>
    %18 = vector.shape_cast %17 : vector<1x1x16x16xbf16> to vector<16x16xbf16>
    %19 = arith.extf %18 : vector<16x16xbf16> to vector<16x16xf32>
    %20 = arith.addf %16, %19 : vector<16x16xf32>
    %c0_18 = arith.constant 0 : index
    %c0_19 = arith.constant 0 : index
    %c0_20 = arith.constant 0 : index
    %21 = vector.load %arg3[%c0_18, %c0_19, %c0_20] : memref<1x1x16xf32, #tpu.memory_space<vmem>>, vector<1x1x16xf32>
    %22 = vector.shape_cast %21 : vector<1x1x16xf32> to vector<1x16xf32>
    %23 = vector.broadcast %22 : vector<1x16xf32> to vector<16x16xf32>
    %24 = arith.addf %20, %23 : vector<16x16xf32>
    %cst_21 = arith.constant dense<0xFF800000> : vector<16xf32>
    %25 = vector.multi_reduction <maximumf>, %24, %cst_21 [1] : vector<16x16xf32> to vector<16xf32>
    %26 = vector.shape_cast %25 : vector<16xf32> to vector<16x1xf32>
    %27 = vector.broadcast %26 : vector<16x1xf32> to vector<16x16xf32>
    %28 = arith.subf %24, %27 : vector<16x16xf32>
    %29 = math.exp %28 : vector<16x16xf32>
    %cst_22 = arith.constant dense<0.000000e+00> : vector<16xf32>
    %30 = vector.multi_reduction <add>, %29, %cst_22 [1] : vector<16x16xf32> to vector<16xf32>
    %31 = vector.shape_cast %30 : vector<16xf32> to vector<16x1xf32>
    %32 = tpu.reciprocal %31 {approx = true} : vector<16x1xf32> -> vector<16x1xf32>
    %33 = vector.broadcast %32 : vector<16x1xf32> to vector<16x16xf32>
    %34 = arith.mulf %29, %33 : vector<16x16xf32>
    %35 = arith.truncf %34 : vector<16x16xf32> to vector<16x16xbf16>
    %cst_23 = arith.constant dense<0.000000e+00> : vector<16x32xf32>
    %36 = tpu.matmul %35, %15, %cst_23 {dimension_numbers = #tpu.dot_dimension_numbers<[1], [0], [0], [1], [0, 0, 1, 1], [], []>} : vector<16x16xbf16>, vector<16x32xbf16>, vector<16x32xf32> -> vector<16x32xf32>
    %c0_24 = arith.constant 0 : index
    %c0_25 = arith.constant 0 : index
    %37 = vector.load %arg12[%c0_24, %c0_25] : memref<16x128xf32, #tpu.memory_space<vmem>>, vector<16x128xf32>
    %38 = arith.truncf %36 : vector<16x32xf32> to vector<16x32xbf16>
    %c0_26 = arith.constant 0 : index
    %c0_27 = arith.constant 0 : index
    %c0_28 = arith.constant 0 : index
    %39 = vector.load %arg8[%c0_26, %c0_27, %c0_28] : memref<1x32x128xbf16, #tpu.memory_space<vmem>>, vector<1x32x128xbf16>
    %40 = vector.shape_cast %39 : vector<1x32x128xbf16> to vector<32x128xbf16>
    %cst_29 = arith.constant dense<0.000000e+00> : vector<16x128xf32>
    %41 = tpu.matmul %38, %40, %cst_29 {dimension_numbers = #tpu.dot_dimension_numbers<[1], [0], [0], [1], [0, 0, 1, 1], [], []>} : vector<16x32xbf16>, vector<32x128xbf16>, vector<16x128xf32> -> vector<16x128xf32>
    %42 = arith.addf %37, %41 : vector<16x128xf32>
    %c0_30 = arith.constant 0 : index
    %c0_31 = arith.constant 0 : index
    %43 = vector.load %arg12[%c0_30, %c0_31] : memref<16x128xf32, #tpu.memory_space<vmem>>, vector<16x128xf32>
    tpu.vector_store %arg12[%c0_30, %c0_31], %42 {strides = array<i32>} : memref<16x128xf32, #tpu.memory_space<vmem>>, vector<16x128xf32>,
    %c3_i32 = arith.constant 3 : i32
    %44 = arith.cmpi eq, %arg1, %c3_i32 : i32
    %45 = arith.extui %44 : i1 to i32
    %c0_i32_32 = arith.constant 0 : i32
    %46 = arith.cmpi ne, %45, %c0_i32_32 : i32
    scf.if %46 {
      %c0_33 = arith.constant 0 : index
      %c0_34 = arith.constant 0 : index
      %47 = vector.load %arg12[%c0_33, %c0_34] : memref<16x128xf32, #tpu.memory_space<vmem>>, vector<16x128xf32>
      %c0_35 = arith.constant 0 : index
      %c0_36 = arith.constant 0 : index
      %c0_37 = arith.constant 0 : index
      %48 = vector.load %arg10[%c0_35, %c0_36, %c0_37] : memref<1x16x128xf32, #tpu.memory_space<vmem>>, vector<1x16x128xf32>
      %49 = vector.shape_cast %48 : vector<1x16x128xf32> to vector<16x128xf32>
      %50 = vector.shape_cast %47 : vector<16x128xf32> to vector<1x16x128xf32>
      tpu.vector_store %arg10[%c0_35, %c0_36, %c0_37], %50 {strides = array<i32>} : memref<1x16x128xf32, #tpu.memory_space<vmem>>, vector<1x16x128xf32>,
    } else {
    }
    return
  }
  func.func @transform_0(%arg0: i32, %arg1: i32) -> (i32, i32, i32) {
    %c0_i32 = arith.constant 0 : i32
    %c0_i32_0 = arith.constant 0 : i32
    %c0_i32_1 = arith.constant 0 : i32
    return %arg0, %c0_i32, %c0_i32_0 : i32, i32, i32
  }
  func.func @transform_1(%arg0: i32, %arg1: i32) -> (i32, i32, i32) {
    %c0_i32 = arith.constant 0 : i32
    %c0_i32_0 = arith.constant 0 : i32
    %c0_i32_1 = arith.constant 0 : i32
    return %arg0, %c0_i32, %c0_i32_0 : i32, i32, i32
  }
  func.func @transform_2(%arg0: i32, %arg1: i32) -> (i32, i32, i32, i32) {
    %c0_i32 = arith.constant 0 : i32
    %c0_i32_0 = arith.constant 0 : i32
    %c0_i32_1 = arith.constant 0 : i32
    %c0_i32_2 = arith.constant 0 : i32
    return %c0_i32, %arg1, %c0_i32_0, %c0_i32_1 : i32, i32, i32, i32
  }
  func.func @transform_3(%arg0: i32, %arg1: i32) -> (i32, i32, i32) {
    %c0_i32 = arith.constant 0 : i32
    %c0_i32_0 = arith.constant 0 : i32
    %c0_i32_1 = arith.constant 0 : i32
    return %arg1, %c0_i32, %c0_i32_0 : i32, i32, i32
  }
  func.func @transform_4(%arg0: i32, %arg1: i32) -> (i32, i32, i32) {
    %c0_i32 = arith.constant 0 : i32
    %c0_i32_0 = arith.constant 0 : i32
    %c0_i32_1 = arith.constant 0 : i32
    return %arg1, %c0_i32, %c0_i32_0 : i32, i32, i32
  }
  func.func @transform_5(%arg0: i32, %arg1: i32) -> (i32, i32, i32) {
    %c0_i32 = arith.constant 0 : i32
    %c0_i32_0 = arith.constant 0 : i32
    %c0_i32_1 = arith.constant 0 : i32
    return %arg1, %c0_i32, %c0_i32_0 : i32, i32, i32
  }
  func.func @transform_6(%arg0: i32, %arg1: i32) -> (i32, i32, i32) {
    %c0_i32 = arith.constant 0 : i32
    %c0_i32_0 = arith.constant 0 : i32
    %c0_i32_1 = arith.constant 0 : i32
    return %arg1, %c0_i32, %c0_i32_0 : i32, i32, i32
  }
  func.func @transform_7(%arg0: i32, %arg1: i32) -> (i32, i32) {
    %c0_i32 = arith.constant 0 : i32
    %c0_i32_0 = arith.constant 0 : i32
    %c0_i32_1 = arith.constant 0 : i32
    return %c0_i32, %c0_i32_0 : i32, i32
  }
  func.func @transform_8(%arg0: i32, %arg1: i32) -> (i32, i32, i32) {
    %c0_i32 = arith.constant 0 : i32
    %c0_i32_0 = arith.constant 0 : i32
    %c0_i32_1 = arith.constant 0 : i32
    return %arg0, %c0_i32, %c0_i32_0 : i32, i32, i32
  }
}

</mosaic_0001>

<llo_original>
// kernel: tpu_custom_call.1
$region0: #{tpu_custom_call.1}
  #allocation0 [shape = 'u32[]', space=smem, size = 0x4, offset = 0x4, fixed_abs, tag = 'smem constant byte address 0x4 - core index']
  #allocation1 [shape = 'u32[72,128]{1,0:T(1,128)}', space=vmem, size = 0x9000, scoped, tag = 'internal scratch']
  #allocation2 [shape = 'bf16[16,128]{1,0:T(8,128)(2,1)}', space=vmem, size = 0x1000, scoped, tag = 'scratch operand']
  #allocation3 [shape = 'f32[16,128]{1,0:T(8,128)}', space=vmem, size = 0x2000, scoped, tag = 'scratch operand']
  %s0 = inlined_call_operand.vmem [shape: f32[2,16,128], index: 0, kind: input, shape index: {}]
  %s1 = inlined_call_operand.vmem [shape: f32[2,1,16], index: 1, kind: input, shape index: {}]
  %s2 = inlined_call_operand.vmem [shape: bf16[1,4,16,16], index: 2, kind: input, shape index: {}]
  %s3 = inlined_call_operand.vmem [shape: bf16[4,128,32], index: 3, kind: input, shape index: {}]
  %s4 = inlined_call_operand.vmem [shape: bf16[4,128,32], index: 4, kind: input, shape index: {}]
  %s5 = inlined_call_operand.vmem [shape: bf16[4,128,32], index: 5, kind: input, shape index: {}]
  %s6 = inlined_call_operand.vmem [shape: bf16[4,32,128], index: 6, kind: input, shape index: {}]
  %s7 = inlined_call_operand.vmem [shape: f32[1,128], index: 7, kind: input, shape index: {}]
  %s8 = inlined_call_operand.hbm [shape: f32[2,16,128], index: 8, kind: output, shape index: {}]
  %s9 = sld [smem:[#allocation0]]
  $region73: #{tpu_custom_call.1} parent=0
    _
  %s11 = ssub.s32 1, %s9
  %s12 = scalar_select 0, %s11, %s9
  $region1: #{tpu_custom_call.1} parent=0
    #allocation4 [shape = 'u8[16384]{0}', space=vmem, size = 0x4000, scoped, tag = 'output window, operand 0']
    #allocation5 [shape = 's32[2]{0}', space=sflag, size = 0x8, scoped, tag = 'scoped memory for tpu_custom_call.1']
    %13 = vsyncpa [#allocation5], 0
    %s14 = scalar_lea.sflag [#allocation5], 1
    %15 = vsyncpa %s14, 0
    loop: start=0, step=1, limit=10
    $region2: #{tpu_custom_call.1} parent=1 // loop_pre_header
      _
    $region3: #{tpu_custom_call.1} parent=1 // loop_header
      %s17 = sphi 0, %s21
      %p18 = scmp.ge.s32.totalorder %s17, 10
      %s24 = sphi 0, %s36
      %s25 = sphi 0, %s32
      %s26 = sphi 0, %s24
      %s27 = sphi 0, %s25
      %s28 = sphi 0, %s26
      %s29 = sphi 0, %s27
      %s39 = sphi 0, %s41
      %s42 = sphi 0, %s39
      %s43 = sphi 0, %s42
      %s59 = sphi 0, %s43
      %s65 = sphi 0, %s67
      %s68 = sphi 0, %s65
      %s69 = sphi 0, %s68
      %s85 = sphi 0, %s69
      %s91 = sphi 0, %s93
      %s94 = sphi 0, %s91
      %s95 = sphi 0, %s94
      %s111 = sphi 0, %s95
      %s117 = sphi 0, %s119
      %s120 = sphi 0, %s117
      %s121 = sphi 0, %s120
      %s137 = sphi 0, %s121
      %s143 = sphi 0, %s145
      %s146 = sphi 0, %s143
      %s147 = sphi 0, %s146
      %s163 = sphi 0, %s147
      %s169 = sphi 0, %s171
      %s172 = sphi 0, %s169
      %s173 = sphi 0, %s172
      %s189 = sphi 0, %s173
      %s195 = sphi 0, %s197
      %s198 = sphi 0, %s195
      %s199 = sphi 0, %s198
      %s215 = sphi 0, %s199
      %s219 = sphi 0, %s219
      %s221 = sphi 0, %s219
      %s222 = sphi 0, %s221
      %s236 = sphi 0, %s222
      %s242 = sphi 0, %s244
      %s245 = sphi 0, %s242
      %s246 = sphi 0, %s245
      %s262 = sphi 0, %s246
    $region4: #{tpu_custom_call.1} parent=1 // loop_header_branch
      %20 = sbr.rel (%p18) target = $region8
    $region5: #{tpu_custom_call.1} parent=1 // loop_body
      %s22 = ssub.s32 %s17, 1
      %s23 = ssub.s32 %s17, 2
      %s30 = sadd.s32 1, %s25
      %p31 = scmp.ge.s32.totalorder %s30, 4
      %s32 = scalar_select %p31, 0, %s30
      %s33 = sadd.s32 1, %s24
      %s34 = scalar_select %p31, %s33, %s24
      %p35 = scmp.ge.s32.totalorder %s34, 2
      %s36 = scalar_select %p35, 0, %s34
      %s37 = ssub.s32 %s24, %s36
      %p38 = scmp.eq.s32.totalorder %s37, 0
      %s40 = sadd.s32 %s39, 1
      %s41 = scalar_select %p38, %s39, %s40
      %p44 = pneg %p38
      %p45 = scmp.eq.s32.totalorder %s17, 7
      %p46 = por %p44, %p45
      %p47 = scmp.ne.s32.totalorder %s39, %s42
      %p48 = scmp.eq.s32.totalorder %s17, 0
      %p49 = por %p47, %p48
      %p50 = scmp.ne.s32.totalorder %s39, %s42
      %p51 = scmp.eq.s32.totalorder %s22, 7
      %p52 = por %p50, %p51
      %p53 = scmp.ne.s32.totalorder %s42, %s43
      %p54 = scmp.eq.s32.totalorder %s22, 0
      %p55 = por %p53, %p54
      %p56 = scmp.ne.s32.totalorder %s42, %s43
      %p57 = scmp.eq.s32.totalorder %s23, 7
      %p58 = por %p56, %p57
      %p60 = scmp.ne.s32.totalorder %s43, %s59
      %p61 = scmp.eq.s32.totalorder %s23, 0
      %p62 = por %p60, %p61
      %s63 = ssub.s32 %s24, %s36
      %p64 = scmp.eq.s32.totalorder %s63, 0
      %s66 = sadd.s32 %s65, 1
      %s67 = scalar_select %p64, %s65, %s66
      %p70 = pneg %p64
      %p71 = scmp.eq.s32.totalorder %s17, 7
      %p72 = por %p70, %p71
      %p73 = scmp.ne.s32.totalorder %s65, %s68
      %p74 = scmp.eq.s32.totalorder %s17, 0
      %p75 = por %p73, %p74
      %p76 = scmp.ne.s32.totalorder %s65, %s68
      %p77 = scmp.eq.s32.totalorder %s22, 7
      %p78 = por %p76, %p77
      %p79 = scmp.ne.s32.totalorder %s68, %s69
      %p80 = scmp.eq.s32.totalorder %s22, 0
      %p81 = por %p79, %p80
      %p82 = scmp.ne.s32.totalorder %s68, %s69
      %p83 = scmp.eq.s32.totalorder %s23, 7
      %p84 = por %p82, %p83
      %p86 = scmp.ne.s32.totalorder %s69, %s85
      %p87 = scmp.eq.s32.totalorder %s23, 0
      %p88 = por %p86, %p87
      %s89 = ssub.s32 %s25, %s32
      %p90 = scmp.eq.s32.totalorder %s89, 0
      %s92 = sadd.s32 %s91, 1
      %s93 = scalar_select %p90, %s91, %s92
      %p96 = pneg %p90
      %p97 = scmp.eq.s32.totalorder %s17, 7
      %p98 = por %p96, %p97
      %p99 = scmp.ne.s32.totalorder %s91, %s94
      %p100 = scmp.eq.s32.totalorder %s17, 0
      %p101 = por %p99, %p100
      %p102 = scmp.ne.s32.totalorder %s91, %s94
      %p103 = scmp.eq.s32.totalorder %s22, 7
      %p104 = por %p102, %p103
      %p105 = scmp.ne.s32.totalorder %s94, %s95
      %p106 = scmp.eq.s32.totalorder %s22, 0
      %p107 = por %p105, %p106
      %p108 = scmp.ne.s32.totalorder %s94, %s95
      %p109 = scmp.eq.s32.totalorder %s23, 7
      %p110 = por %p108, %p109
      %p112 = scmp.ne.s32.totalorder %s95, %s111
      %p113 = scmp.eq.s32.totalorder %s23, 0
      %p114 = por %p112, %p113
      %s115 = ssub.s32 %s25, %s32
      %p116 = scmp.eq.s32.totalorder %s115, 0
      %s118 = sadd.s32 %s117, 1
      %s119 = scalar_select %p116, %s117, %s118
      %p122 = pneg %p116
      %p123 = scmp.eq.s32.totalorder %s17, 7
      %p124 = por %p122, %p123
      %p125 = scmp.ne.s32.totalorder %s117, %s120
      %p126 = scmp.eq.s32.totalorder %s17, 0
      %p127 = por %p125, %p126
      %p128 = scmp.ne.s32.totalorder %s117, %s120
      %p129 = scmp.eq.s32.totalorder %s22, 7
      %p130 = por %p128, %p129
      %p131 = scmp.ne.s32.totalorder %s120, %s121
      %p132 = scmp.eq.s32.totalorder %s22, 0
      %p133 = por %p131, %p132
      %p134 = scmp.ne.s32.totalorder %s120, %s121
      %p135 = scmp.eq.s32.totalorder %s23, 7
      %p136 = por %p134, %p135
      %p138 = scmp.ne.s32.totalorder %s121, %s137
      %p139 = scmp.eq.s32.totalorder %s23, 0
      %p140 = por %p138, %p139
      %s141 = ssub.s32 %s25, %s32
      %p142 = scmp.eq.s32.totalorder %s141, 0
      %s144 = sadd.s32 %s143, 1
      %s145 = scalar_select %p142, %s143, %s144
      %p148 = pneg %p142
      %p149 = scmp.eq.s32.totalorder %s17, 7
      %p150 = por %p148, %p149
      %p151 = scmp.ne.s32.totalorder %s143, %s146
      %p152 = scmp.eq.s32.totalorder %s17, 0
      %p153 = por %p151, %p152
      %p154 = scmp.ne.s32.totalorder %s143, %s146
      %p155 = scmp.eq.s32.totalorder %s22, 7
      %p156 = por %p154, %p155
      %p157 = scmp.ne.s32.totalorder %s146, %s147
      %p158 = scmp.eq.s32.totalorder %s22, 0
      %p159 = por %p157, %p158
      %p160 = scmp.ne.s32.totalorder %s146, %s147
      %p161 = scmp.eq.s32.totalorder %s23, 7
      %p162 = por %p160, %p161
      %p164 = scmp.ne.s32.totalorder %s147, %s163
      %p165 = scmp.eq.s32.totalorder %s23, 0
      %p166 = por %p164, %p165
      %s167 = ssub.s32 %s25, %s32
      %p168 = scmp.eq.s32.totalorder %s167, 0
      %s170 = sadd.s32 %s169, 1
      %s171 = scalar_select %p168, %s169, %s170
      %p174 = pneg %p168
      %p175 = scmp.eq.s32.totalorder %s17, 7
      %p176 = por %p174, %p175
      %p177 = scmp.ne.s32.totalorder %s169, %s172
      %p178 = scmp.eq.s32.totalorder %s17, 0
      %p179 = por %p177, %p178
      %p180 = scmp.ne.s32.totalorder %s169, %s172
      %p181 = scmp.eq.s32.totalorder %s22, 7
      %p182 = por %p180, %p181
      %p183 = scmp.ne.s32.totalorder %s172, %s173
      %p184 = scmp.eq.s32.totalorder %s22, 0
      %p185 = por %p183, %p184
      %p186 = scmp.ne.s32.totalorder %s172, %s173
      %p187 = scmp.eq.s32.totalorder %s23, 7
      %p188 = por %p186, %p187
      %p190 = scmp.ne.s32.totalorder %s173, %s189
      %p191 = scmp.eq.s32.totalorder %s23, 0
      %p192 = por %p190, %p191
      %s193 = ssub.s32 %s25, %s32
      %p194 = scmp.eq.s32.totalorder %s193, 0
      %s196 = sadd.s32 %s195, 1
      %s197 = scalar_select %p194, %s195, %s196
      %p200 = pneg %p194
      %p201 = scmp.eq.s32.totalorder %s17, 7
      %p202 = por %p200, %p201
      %p203 = scmp.ne.s32.totalorder %s195, %s198
      %p204 = scmp.eq.s32.totalorder %s17, 0
      %p205 = por %p203, %p204
      %p206 = scmp.ne.s32.totalorder %s195, %s198
      %p207 = scmp.eq.s32.totalorder %s22, 7
      %p208 = por %p206, %p207
      %p209 = scmp.ne.s32.totalorder %s198, %s199
      %p210 = scmp.eq.s32.totalorder %s22, 0
      %p211 = por %p209, %p210
      %p212 = scmp.ne.s32.totalorder %s198, %s199
      %p213 = scmp.eq.s32.totalorder %s23, 7
      %p214 = por %p212, %p213
      %p216 = scmp.ne.s32.totalorder %s199, %s215
      %p217 = scmp.eq.s32.totalorder %s23, 0
      %p218 = por %p216, %p217
      %s220 = sadd.s32 %s219, 1
      %p223 = scmp.eq.s32.totalorder %s17, 7
      %p224 = scmp.ne.s32.totalorder %s219, %s221
      %p225 = scmp.eq.s32.totalorder %s17, 0
      %p226 = por %p224, %p225
      %p227 = scmp.ne.s32.totalorder %s219, %s221
      %p228 = scmp.eq.s32.totalorder %s22, 7
      %p229 = por %p227, %p228
      %p230 = scmp.ne.s32.totalorder %s221, %s222
      %p231 = scmp.eq.s32.totalorder %s22, 0
      %p232 = por %p230, %p231
      %p233 = scmp.ne.s32.totalorder %s221, %s222
      %p234 = scmp.eq.s32.totalorder %s23, 7
      %p235 = por %p233, %p234
      %p237 = scmp.ne.s32.totalorder %s222, %s236
      %p238 = scmp.eq.s32.totalorder %s23, 0
      %p239 = por %p237, %p238
      %s240 = ssub.s32 %s24, %s36
      %p241 = scmp.eq.s32.totalorder %s240, 0
      %s243 = sadd.s32 %s242, 1
      %s244 = scalar_select %p241, %s242, %s243
      %p247 = pneg %p241
      %p248 = scmp.eq.s32.totalorder %s17, 7
      %p249 = por %p247, %p248
      %p250 = scmp.ne.s32.totalorder %s242, %s245
      %p251 = scmp.eq.s32.totalorder %s17, 0
      %p252 = por %p250, %p251
      %p253 = scmp.ne.s32.totalorder %s242, %s245
      %p254 = scmp.eq.s32.totalorder %s22, 7
      %p255 = por %p253, %p254
      %p256 = scmp.ne.s32.totalorder %s245, %s246
      %p257 = scmp.eq.s32.totalorder %s22, 0
      %p258 = por %p256, %p257
      %p259 = scmp.ne.s32.totalorder %s245, %s246
      %p260 = scmp.eq.s32.totalorder %s23, 7
      %p261 = por %p259, %p260
      %p263 = scmp.ne.s32.totalorder %s246, %s262
      %p264 = scmp.eq.s32.totalorder %s23, 0
      %p265 = por %p263, %p264
      %p266 = scmp.le.s32.totalorder 1, %s17
      %p267 = scmp.lt.s32.totalorder %s17, 9
      %p268 = pnand %p266, %p267
      %p269 = pneg %p268
      // Predicated region
      $region9: #{tpu_custom_call.1} parent=5 // pred_check
        _
      $region10: #{tpu_custom_call.1} parent=5 // pred_check_branch
        %271 = sbr.rel (%p268) target = $region12
      $region11: #{tpu_custom_call.1} parent=5 // pred_region
        %s272 = ssub.s32 %s17, 1
        // Predicated region
        $region13: #{tpu_custom_call.1} parent=11 // pred_check
          %p273 = pneg %p232
        $region14: #{tpu_custom_call.1} parent=11 // pred_check_branch
          %275 = sbr.rel (%p273) target = $region16
        $region15: #{tpu_custom_call.1} parent=11 // pred_region
          _
        $region16: #{tpu_custom_call.1} parent=11 // pred_fallthru
          _
      $region12: #{tpu_custom_call.1} parent=5 // pred_fallthru
        _
      %p276 = scmp.lt.s32.totalorder %s17, 8
      // Predicated region
      $region17: #{tpu_custom_call.1} parent=5 // pred_check
        %p277 = pneg %p276
      $region18: #{tpu_custom_call.1} parent=5 // pred_check_branch
        %279 = sbr.rel (%p277) target = $region20
      $region19: #{tpu_custom_call.1} parent=5 // pred_region
        // Predicated region
        $region21: #{tpu_custom_call.1} parent=19 // pred_check
          %p280 = pneg %p49
        $region22: #{tpu_custom_call.1} parent=19 // pred_check_branch
          %282 = sbr.rel (%p280) target = $region24
        $region23: #{tpu_custom_call.1} parent=19 // pred_region
          %p283 = scmp.lt.s32.totalorder %s24, 1
          %s284 = scalar_select %p283, %s24, 1
          %s285 = smul.addr %s284, 2
          %s286 = smul.addr %s285, 8
          %s287 = scalar_lea.vmem %s0, %s286
        $region24: #{tpu_custom_call.1} parent=19 // pred_fallthru
          _
        // Predicated region
        $region25: #{tpu_custom_call.1} parent=19 // pred_check
          %p288 = pneg %p75
        $region26: #{tpu_custom_call.1} parent=19 // pred_check_branch
          %290 = sbr.rel (%p288) target = $region28
        $region27: #{tpu_custom_call.1} parent=19 // pred_region
          %p291 = scmp.lt.s32.totalorder %s24, 1
          %s292 = scalar_select %p291, %s24, 1
          %s293 = scalar_lea.vmem %s1, %s292
        $region28: #{tpu_custom_call.1} parent=19 // pred_fallthru
          _
        // Predicated region
        $region29: #{tpu_custom_call.1} parent=19 // pred_check
          %p294 = pneg %p101
        $region30: #{tpu_custom_call.1} parent=19 // pred_check_branch
          %296 = sbr.rel (%p294) target = $region32
        $region31: #{tpu_custom_call.1} parent=19 // pred_region
          %p297 = scmp.lt.s32.totalorder %s25, 3
          %s298 = scalar_select %p297, %s25, 3
          %s299 = smul.addr %s298, 2
          %s300 = smul.addr %s299, 4
          %s301 = scalar_lea.vmem %s2, %s300
        $region32: #{tpu_custom_call.1} parent=19 // pred_fallthru
          _
        // Predicated region
        $region33: #{tpu_custom_call.1} parent=19 // pred_check
          %p302 = pneg %p127
        $region34: #{tpu_custom_call.1} parent=19 // pred_check_branch
          %304 = sbr.rel (%p302) target = $region36
        $region35: #{tpu_custom_call.1} parent=19 // pred_region
          %p305 = scmp.lt.s32.totalorder %s25, 3
          %s306 = scalar_select %p305, %s25, 3
          %s307 = smul.addr %s306, 16
          %s308 = smul.addr %s307, 4
          %s309 = scalar_lea.vmem %s3, %s308
        $region36: #{tpu_custom_call.1} parent=19 // pred_fallthru
          _
        // Predicated region
        $region37: #{tpu_custom_call.1} parent=19 // pred_check
          %p310 = pneg %p153
        $region38: #{tpu_custom_call.1} parent=19 // pred_check_branch
          %312 = sbr.rel (%p310) target = $region40
        $region39: #{tpu_custom_call.1} parent=19 // pred_region
          %p313 = scmp.lt.s32.totalorder %s25, 3
          %s314 = scalar_select %p313, %s25, 3
          %s315 = smul.addr %s314, 16
          %s316 = smul.addr %s315, 4
          %s317 = scalar_lea.vmem %s4, %s316
        $region40: #{tpu_custom_call.1} parent=19 // pred_fallthru
          _
        // Predicated region
        $region41: #{tpu_custom_call.1} parent=19 // pred_check
          %p318 = pneg %p179
        $region42: #{tpu_custom_call.1} parent=19 // pred_check_branch
          %320 = sbr.rel (%p318) target = $region44
        $region43: #{tpu_custom_call.1} parent=19 // pred_region
          %p321 = scmp.lt.s32.totalorder %s25, 3
          %s322 = scalar_select %p321, %s25, 3
          %s323 = smul.addr %s322, 16
          %s324 = smul.addr %s323, 4
          %s325 = scalar_lea.vmem %s5, %s324
        $region44: #{tpu_custom_call.1} parent=19 // pred_fallthru
          _
        // Predicated region
        $region45: #{tpu_custom_call.1} parent=19 // pred_check
          %p326 = pneg %p205
        $region46: #{tpu_custom_call.1} parent=19 // pred_check_branch
          %328 = sbr.rel (%p326) target = $region48
        $region47: #{tpu_custom_call.1} parent=19 // pred_region
          %p329 = scmp.lt.s32.totalorder %s25, 3
          %s330 = scalar_select %p329, %s25, 3
          %s331 = smul.addr %s330, 4
          %s332 = smul.addr %s331, 4
          %s333 = scalar_lea.vmem %s6, %s332
        $region48: #{tpu_custom_call.1} parent=19 // pred_fallthru
          _
      $region20: #{tpu_custom_call.1} parent=5 // pred_fallthru
        _
      %p334 = scmp.le.s32.totalorder 1, %s17
      %p335 = scmp.lt.s32.totalorder %s17, 9
      %p336 = pnand %p334, %p335
      %p337 = pneg %p336
      // Predicated region
      $region49: #{tpu_custom_call.1} parent=5 // pred_check
        _
      $region50: #{tpu_custom_call.1} parent=5 // pred_check_branch
        %339 = sbr.rel (%p336) target = $region52
      $region51: #{tpu_custom_call.1} parent=5 // pred_region
        %s340 = ssub.s32 %s17, 1
        %p341 = scmp.lt.s32.totalorder %s26, 1
        %s342 = scalar_select %p341, %s26, 1
        %s343 = smul.addr %s342, 2
        %s344 = smul.addr %s343, 8
        %s345 = scalar_lea.vmem %s0, %s344
        %p346 = pneg %p55
        %p347 = pneg %p52
        %p348 = scmp.lt.s32.totalorder %s26, 1
        %s349 = scalar_select %p348, %s26, 1
        %s350 = scalar_lea.vmem %s1, %s349
        %p351 = pneg %p81
        %p352 = pneg %p78
        %p353 = scmp.lt.s32.totalorder %s27, 3
        %s354 = scalar_select %p353, %s27, 3
        %s355 = smul.addr %s354, 2
        %s356 = smul.addr %s355, 4
        %s357 = scalar_lea.vmem %s2, %s356
        %p358 = pneg %p107
        %p359 = pneg %p104
        %p360 = scmp.lt.s32.totalorder %s27, 3
        %s361 = scalar_select %p360, %s27, 3
        %s362 = smul.addr %s361, 16
        %s363 = smul.addr %s362, 4
        %s364 = scalar_lea.vmem %s3, %s363
        %p365 = pneg %p133
        %p366 = pneg %p130
        %p367 = scmp.lt.s32.totalorder %s27, 3
        %s368 = scalar_select %p367, %s27, 3
        %s369 = smul.addr %s368, 16
        %s370 = smul.addr %s369, 4
        %s371 = scalar_lea.vmem %s4, %s370
        %p372 = pneg %p159
        %p373 = pneg %p156
        %p374 = scmp.lt.s32.totalorder %s27, 3
        %s375 = scalar_select %p374, %s27, 3
        %s376 = smul.addr %s375, 16
        %s377 = smul.addr %s376, 4
        %s378 = scalar_lea.vmem %s5, %s377
        %p379 = pneg %p185
        %p380 = pneg %p182
        %p381 = scmp.lt.s32.totalorder %s27, 3
        %s382 = scalar_select %p381, %s27, 3
        %s383 = smul.addr %s382, 4
        %s384 = smul.addr %s383, 4
        %s385 = scalar_lea.vmem %s6, %s384
        %p386 = pneg %p211
        %p387 = pneg %p208
        %p388 = pneg %p232
        %p389 = pneg %p229
        %p390 = pneg %p258
        %p391 = pneg %p255
        %s392 = sand.u32 %s245, 1
        %s393 = scalar_lea.sflag [#allocation5], %s392
        %s394 = sand.u32 %s245, 1
        %s395 = smul.addr %s394, 16
        %s396 = scalar_lea.vmem [#allocation4], %s395
        %p397 = scmp.lt.s32.totalorder %s26, 1
        %s398 = scalar_select %p397, %s26, 1
        %s399 = smul.addr %s398, 2
        %s400 = smul.addr %s399, 8
        %s401 = scalar_lea.vmem %s0, %s400
        %p402 = scmp.lt.s32.totalorder %s26, 1
        %s403 = scalar_select %p402, %s26, 1
        %s404 = scalar_lea.vmem %s1, %s403
        %p405 = scmp.lt.s32.totalorder %s27, 3
        %s406 = scalar_select %p405, %s27, 3
        %s407 = smul.addr %s406, 2
        %s408 = smul.addr %s407, 4
        %s409 = scalar_lea.vmem %s2, %s408
        %p410 = scmp.lt.s32.totalorder %s27, 3
        %s411 = scalar_select %p410, %s27, 3
        %s412 = smul.addr %s411, 16
        %s413 = smul.addr %s412, 4
        %s414 = scalar_lea.vmem %s3, %s413
        %p415 = scmp.lt.s32.totalorder %s27, 3
        %s416 = scalar_select %p415, %s27, 3
        %s417 = smul.addr %s416, 16
        %s418 = smul.addr %s417, 4
        %s419 = scalar_lea.vmem %s4, %s418
        %p420 = scmp.lt.s32.totalorder %s27, 3
        %s421 = scalar_select %p420, %s27, 3
        %s422 = smul.addr %s421, 16
        %s423 = smul.addr %s422, 4
        %s424 = scalar_lea.vmem %s5, %s423
        %p425 = scmp.lt.s32.totalorder %s27, 3
        %s426 = scalar_select %p425, %s27, 3
        %s427 = smul.addr %s426, 4
        %s428 = smul.addr %s427, 4
        %s429 = scalar_lea.vmem %s6, %s428
        %p431 = scmp.eq.s32.totalorder %s27, 0
        // Predicated region
        $region53: #{tpu_custom_call.1} parent=51 // pred_check
          %p432 = pneg %p431
        $region54: #{tpu_custom_call.1} parent=51 // pred_check_branch
          %434 = sbr.rel (%p432) target = $region56
        $region55: #{tpu_custom_call.1} parent=51 // pred_region
          %v435 = vld [vmem:[%s401] sm:$0xff]
          %v436 = vld [vmem:[%s401 + $0x8] sm:$0xff]
          %v437 = vmul.f32 %v435, %v435
          %v438 = vmul.f32 %v436, %v436
          %439 = vadd.xlane.f32.xlu0 %v437
          %v440 = vpop.xlane.xlu0 %439
          %441 = vadd.xlane.f32.xlu0 %v438
          %v442 = vpop.xlane.xlu0 %441
          %v443 = vrcp.pop 128.0
          %v444 = vmul.f32 128.0, %v443
          %v445 = vsub.f32 1.0, %v444
          %v446 = vmul.f32 %v443, %v445
          %v447 = vadd.f32 %v443, %v446
          %vm448 = vweird.f32 %v443
          %v449 = vsel %vm448, %v443, %v447
          %v450 = vmul.f32 %v440, %v449
          %v451 = vmul.f32 %v442, %v449
          %v452 = vadd.f32 %v450, 1e-06
          %v453 = vadd.f32 %v451, 1e-06
          %v454 = vrsqrt.pop %v452
          %v455 = vmul.f32 %v454, %v452
          %v456 = vmul.f32 %v455, %v454
          %v457 = vmul.f32 0.5, %v456
          %v458 = vsub.f32 1.5, %v457
          %v459 = vmul.f32 %v454, %v458
          %vm460 = vweird.f32 %v452
          %vm461 = vweird.f32 %v454
          %vm462 = vmor %vm460, %vm461
          %v463 = vsel %vm462, %v454, %v459
          %v464 = vrsqrt.pop %v453
          %v465 = vmul.f32 %v464, %v453
          %v466 = vmul.f32 %v465, %v464
          %v467 = vmul.f32 0.5, %v466
          %v468 = vsub.f32 1.5, %v467
          %v469 = vmul.f32 %v464, %v468
          %vm470 = vweird.f32 %v453
          %vm471 = vweird.f32 %v464
          %vm472 = vmor %vm470, %vm471
          %v473 = vsel %vm472, %v464, %v469
          %v474 = vmul.f32 %v435, %v463
          %v475 = vmul.f32 %v436, %v473
          %v476 = vld [vmem:[%s7] sm:$0x1]
          %v478 = vperm.slane %v476, 0
          %v480 = vmul.f32 %v474, %v478
          %v481 = vmul.f32 %v475, %v478
          %v482 = vpack.c.bf16 %v480, %v480
          %v483 = vpack.c.bf16 %v481, %v481
          %484 = vst [vmem:[#allocation2] sm:$0xf] %v482
          %485 = vst [vmem:[#allocation2 + $0x4] sm:$0xf] %v483
          %486 = vst [vmem:[#allocation3] sm:$0xff] %v435
          %487 = vst [vmem:[#allocation3 + $0x8] sm:$0xff] %v436
        $region56: #{tpu_custom_call.1} parent=51 // pred_fallthru
          _
        %v488 = vld [vmem:[#allocation2] sm:$0xf]
        %v489 = vld [vmem:[#allocation2 + $0x4] sm:$0xf]
        %v490 = vld [vmem:[%s414] sm:$0xf]
        %v491 = vld [vmem:[%s414 + $0x4] sm:$0xf]
        %v492 = vld [vmem:[%s414 + $0x8] sm:$0xf]
        %v493 = vld [vmem:[%s414 + $0xc] sm:$0xf]
        %v494 = vld [vmem:[%s414 + $0x10] sm:$0xf]
        %v495 = vld [vmem:[%s414 + $0x14] sm:$0xf]
        %v496 = vld [vmem:[%s414 + $0x18] sm:$0xf]
        %v497 = vld [vmem:[%s414 + $0x1c] sm:$0xf]
        %v498 = vld [vmem:[%s414 + $0x20] sm:$0xf]
        %v499 = vld [vmem:[%s414 + $0x24] sm:$0xf]
        %v500 = vld [vmem:[%s414 + $0x28] sm:$0xf]
        %v501 = vld [vmem:[%s414 + $0x2c] sm:$0xf]
        %v502 = vld [vmem:[%s414 + $0x30] sm:$0xf]
        %v503 = vld [vmem:[%s414 + $0x34] sm:$0xf]
        %v504 = vld [vmem:[%s414 + $0x38] sm:$0xf]
        %v505 = vld [vmem:[%s414 + $0x3c] sm:$0xf]
        %v508 = vunpack.c.l.b16 %v488
        %v509 = vunpack.c.l.b16 %v489
        %v510 = vpack.c.b16 %v509, %v508
        %v528 = vunpack.c.l.b16 %v490
        %v529 = vunpack.c.l.b16 %v491
        %v530 = vunpack.c.l.b16 %v492
        %v531 = vunpack.c.l.b16 %v493
        %v532 = vunpack.c.l.b16 %v494
        %v533 = vunpack.c.l.b16 %v495
        %v534 = vunpack.c.l.b16 %v496
        %v535 = vunpack.c.l.b16 %v497
        %v536 = vunpack.c.l.b16 %v498
        %v537 = vunpack.c.l.b16 %v499
        %v538 = vunpack.c.l.b16 %v500
        %v539 = vunpack.c.l.b16 %v501
        %v540 = vunpack.c.l.b16 %v502
        %v541 = vunpack.c.l.b16 %v503
        %v542 = vunpack.c.l.b16 %v504
        %v543 = vunpack.c.l.b16 %v505
        %v544 = vpack.c.b16 %v529, %v528
        %v545 = vpack.c.b16 %v531, %v530
        %v546 = vpack.c.b16 %v533, %v532
        %v547 = vpack.c.b16 %v535, %v534
        %v548 = vpack.c.b16 %v537, %v536
        %v549 = vpack.c.b16 %v539, %v538
        %v550 = vpack.c.b16 %v541, %v540
        %v551 = vpack.c.b16 %v543, %v542
        %560 = vmatpush.bf16.msra.mxu0 %v551
        %561 = vmatpush.bf16.msra.mxu0 %v550
        %562 = vmatpush.bf16.msra.mxu0 %v549
        %563 = vmatpush.bf16.msra.mxu0 %v548
        %564 = vmatpush.bf16.msra.mxu0 %v547
        %565 = vmatpush.bf16.msra.mxu0 %v546
        %566 = vmatpush.bf16.msra.mxu0 %v545
        %567 = vmatpush.bf16.msra.mxu0 %v544
        %568 = vmatmul.bf16.gmra.mxu0 %v510
        %v569 = vpop.f32.mrf.mxu0
        %v570 = vadd.f32 0.0, %v569
        %v571 = vpop.f32.mrf.mxu0
        %v572 = vadd.f32 0.0, %v571
        %573 = vdwg.mxu0
        %v574 = vpack.c.bf16 %v572, %v570
        %v575 = vld [vmem:[%s419] sm:$0xf]
        %v576 = vld [vmem:[%s419 + $0x4] sm:$0xf]
        %v577 = vld [vmem:[%s419 + $0x8] sm:$0xf]
        %v578 = vld [vmem:[%s419 + $0xc] sm:$0xf]
        %v579 = vld [vmem:[%s419 + $0x10] sm:$0xf]
        %v580 = vld [vmem:[%s419 + $0x14] sm:$0xf]
        %v581 = vld [vmem:[%s419 + $0x18] sm:$0xf]
        %v582 = vld [vmem:[%s419 + $0x1c] sm:$0xf]
        %v583 = vld [vmem:[%s419 + $0x20] sm:$0xf]
        %v584 = vld [vmem:[%s419 + $0x24] sm:$0xf]
        %v585 = vld [vmem:[%s419 + $0x28] sm:$0xf]
        %v586 = vld [vmem:[%s419 + $0x2c] sm:$0xf]
        %v587 = vld [vmem:[%s419 + $0x30] sm:$0xf]
        %v588 = vld [vmem:[%s419 + $0x34] sm:$0xf]
        %v589 = vld [vmem:[%s419 + $0x38] sm:$0xf]
        %v590 = vld [vmem:[%s419 + $0x3c] sm:$0xf]
        %v607 = vunpack.c.l.b16 %v575
        %v608 = vunpack.c.l.b16 %v576
        %v609 = vunpack.c.l.b16 %v577
        %v610 = vunpack.c.l.b16 %v578
        %v611 = vunpack.c.l.b16 %v579
        %v612 = vunpack.c.l.b16 %v580
        %v613 = vunpack.c.l.b16 %v581
        %v614 = vunpack.c.l.b16 %v582
        %v615 = vunpack.c.l.b16 %v583
        %v616 = vunpack.c.l.b16 %v584
        %v617 = vunpack.c.l.b16 %v585
        %v618 = vunpack.c.l.b16 %v586
        %v619 = vunpack.c.l.b16 %v587
        %v620 = vunpack.c.l.b16 %v588
        %v621 = vunpack.c.l.b16 %v589
        %v622 = vunpack.c.l.b16 %v590
        %v623 = vpack.c.b16 %v608, %v607
        %v624 = vpack.c.b16 %v610, %v609
        %v625 = vpack.c.b16 %v612, %v611
        %v626 = vpack.c.b16 %v614, %v613
        %v627 = vpack.c.b16 %v616, %v615
        %v628 = vpack.c.b16 %v618, %v617
        %v629 = vpack.c.b16 %v620, %v619
        %v630 = vpack.c.b16 %v622, %v621
        %639 = vmatpush.bf16.msra.mxu0 %v630
        %640 = vmatpush.bf16.msra.mxu0 %v629
        %641 = vmatpush.bf16.msra.mxu0 %v628
        %642 = vmatpush.bf16.msra.mxu0 %v627
        %643 = vmatpush.bf16.msra.mxu0 %v626
        %644 = vmatpush.bf16.msra.mxu0 %v625
        %645 = vmatpush.bf16.msra.mxu0 %v624
        %646 = vmatpush.bf16.msra.mxu0 %v623
        %647 = vmatmul.bf16.gmra.mxu0 %v510
        %v648 = vpop.f32.mrf.mxu0
        %v649 = vadd.f32 0.0, %v648
        %v650 = vpop.f32.mrf.mxu0
        %v651 = vadd.f32 0.0, %v650
        %652 = vdwg.mxu0
        %v653 = vpack.c.bf16 %v651, %v649
        %v654 = vld [vmem:[%s424] sm:$0xf]
        %v655 = vld [vmem:[%s424 + $0x4] sm:$0xf]
        %v656 = vld [vmem:[%s424 + $0x8] sm:$0xf]
        %v657 = vld [vmem:[%s424 + $0xc] sm:$0xf]
        %v658 = vld [vmem:[%s424 + $0x10] sm:$0xf]
        %v659 = vld [vmem:[%s424 + $0x14] sm:$0xf]
        %v660 = vld [vmem:[%s424 + $0x18] sm:$0xf]
        %v661 = vld [vmem:[%s424 + $0x1c] sm:$0xf]
        %v662 = vld [vmem:[%s424 + $0x20] sm:$0xf]
        %v663 = vld [vmem:[%s424 + $0x24] sm:$0xf]
        %v664 = vld [vmem:[%s424 + $0x28] sm:$0xf]
        %v665 = vld [vmem:[%s424 + $0x2c] sm:$0xf]
        %v666 = vld [vmem:[%s424 + $0x30] sm:$0xf]
        %v667 = vld [vmem:[%s424 + $0x34] sm:$0xf]
        %v668 = vld [vmem:[%s424 + $0x38] sm:$0xf]
        %v669 = vld [vmem:[%s424 + $0x3c] sm:$0xf]
        %v686 = vunpack.c.l.b16 %v654
        %v687 = vunpack.c.l.b16 %v655
        %v688 = vunpack.c.l.b16 %v656
        %v689 = vunpack.c.l.b16 %v657
        %v690 = vunpack.c.l.b16 %v658
        %v691 = vunpack.c.l.b16 %v659
        %v692 = vunpack.c.l.b16 %v660
        %v693 = vunpack.c.l.b16 %v661
        %v694 = vunpack.c.l.b16 %v662
        %v695 = vunpack.c.l.b16 %v663
        %v696 = vunpack.c.l.b16 %v664
        %v697 = vunpack.c.l.b16 %v665
        %v698 = vunpack.c.l.b16 %v666
        %v699 = vunpack.c.l.b16 %v667
        %v700 = vunpack.c.l.b16 %v668
        %v701 = vunpack.c.l.b16 %v669
        %v702 = vpack.c.b16 %v687, %v686
        %v703 = vpack.c.b16 %v689, %v688
        %v704 = vpack.c.b16 %v691, %v690
        %v705 = vpack.c.b16 %v693, %v692
        %v706 = vpack.c.b16 %v695, %v694
        %v707 = vpack.c.b16 %v697, %v696
        %v708 = vpack.c.b16 %v699, %v698
        %v709 = vpack.c.b16 %v701, %v700
        %718 = vmatpush.bf16.msra.mxu0 %v709
        %719 = vmatpush.bf16.msra.mxu0 %v708
        %720 = vmatpush.bf16.msra.mxu0 %v707
        %721 = vmatpush.bf16.msra.mxu0 %v706
        %722 = vmatpush.bf16.msra.mxu0 %v705
        %723 = vmatpush.bf16.msra.mxu0 %v704
        %724 = vmatpush.bf16.msra.mxu0 %v703
        %725 = vmatpush.bf16.msra.mxu0 %v702
        %726 = vmatmul.bf16.gmra.mxu0 %v510
        %v727 = vpop.f32.mrf.mxu0
        %v728 = vadd.f32 0.0, %v727
        %v729 = vpop.f32.mrf.mxu0
        %v730 = vadd.f32 0.0, %v729
        %731 = vdwg.mxu0
        %v732 = vpack.c.bf16 %v730, %v728
        %v733 = vld [vmem:[%s409] sm:$0xf]
        %v734 = vld [vmem:[%s409 + $0x4] sm:$0xf]
        %v735 = vunpack.c.l.bf16 %v733
        %v736 = vunpack.c.l.bf16 %v734
        %vm737 = vcmask 261120
        %v739 = vsel %vm737, %v574, 0
        %v742 = vsel %vm737, %v653, 0
        %744 = vmatpush.bf16.xpose.msra.mxu0 0
        %745 = vmatpush.bf16.xpose.msra.mxu0 0
        %746 = vmatpush.bf16.xpose.msra.mxu0 0
        %747 = vmatpush.bf16.xpose.msra.mxu0 0
        %748 = vmatpush.bf16.xpose.msra.mxu0 0
        %749 = vmatpush.bf16.xpose.msra.mxu0 0
        %750 = vmatpush.bf16.xpose.msra.mxu0 0
        %751 = vmatpush.bf16.xpose.msra.mxu0 %v742
        %752 = vmatmul.bf16.gmra.mxu0 %v739
        %v753 = vpop.f32.mrf.mxu0
        %v754 = vadd.f32 %v735, %v753
        %v755 = vpop.f32.mrf.mxu0
        %v756 = vadd.f32 %v736, %v755
        %757 = vdwg.mxu0
        %v758 = vld [vmem:[%s404] sm:$0x1]
        %v760 = vperm.slane %v758, 0
        %v762 = vadd.f32 %v754, %v760
        %v763 = vadd.f32 %v756, %v760
        %vm764 = vcmask 130048
        %v765 = vsel %vm764, %v762, -inf
        %766 = vmax.xlane.f32.xlu0 %v765
        %v767 = vpop.xlane.xlu0 %766
        %v768 = vsel %vm764, %v763, -inf
        %769 = vmax.xlane.f32.xlu0 %v768
        %v770 = vpop.xlane.xlu0 %769
        %v771 = vsub.f32 %v762, %v767
        %v772 = vsub.f32 %v763, %v770
        %v773 = vmul.f32 %v771, 1.442695
        %v774 = vpow.pop %v773
        %v775 = vmul.f32 %v772, 1.442695
        %v776 = vpow.pop %v775
        %v777 = vsel %vm764, %v774, 0.0
        %778 = vadd.xlane.f32.xlu0 %v777
        %v779 = vpop.xlane.xlu0 %778
        %v780 = vsel %vm764, %v776, 0.0
        %781 = vadd.xlane.f32.xlu0 %v780
        %v782 = vpop.xlane.xlu0 %781
        %v783 = vrcp.pop %v779
        %v784 = vrcp.pop %v782
        %v785 = vmul.f32 %v774, %v783
        %v786 = vmul.f32 %v776, %v784
        %v787 = vpack.c.bf16 %v786, %v785
        %v789 = vsel %vm764, %v787, 0
        %791 = vmatpush.bf16.msra.mxu0 0
        %792 = vmatpush.bf16.msra.mxu0 0
        %793 = vmatpush.bf16.msra.mxu0 0
        %794 = vmatpush.bf16.msra.mxu0 0
        %795 = vmatpush.bf16.msra.mxu0 0
        %796 = vmatpush.bf16.msra.mxu0 0
        %797 = vmatpush.bf16.msra.mxu0 0
        %798 = vmatpush.bf16.msra.mxu0 %v732
        %799 = vmatmul.bf16.gmra.mxu0 %v789
        %v800 = vpop.f32.mrf.mxu0
        %v801 = vadd.f32 0.0, %v800
        %v802 = vpop.f32.mrf.mxu0
        %v803 = vadd.f32 0.0, %v802
        %804 = vdwg.mxu0
        %v805 = vld [vmem:[#allocation3] sm:$0xff]
        %v806 = vld [vmem:[#allocation3 + $0x8] sm:$0xff]
        %v807 = vpack.c.bf16 %v803, %v801
        %v808 = vld [vmem:[%s429] sm:$0xf]
        %v809 = vld [vmem:[%s429 + $0x4] sm:$0xf]
        %v810 = vld [vmem:[%s429 + $0x8] sm:$0xf]
        %v811 = vld [vmem:[%s429 + $0xc] sm:$0xf]
        %v816 = vunpack.c.l.b16 %v808
        %v817 = vunpack.c.l.b16 %v809
        %v818 = vunpack.c.l.b16 %v810
        %v819 = vunpack.c.l.b16 %v811
        %v820 = vpack.c.b16 %v817, %v816
        %v821 = vpack.c.b16 %v819, %v818
        %v825 = vsel %vm737, %v807, 0
        %827 = vmatpush.bf16.msra.mxu0 0
        %828 = vmatpush.bf16.msra.mxu0 0
        %829 = vmatpush.bf16.msra.mxu0 0
        %830 = vmatpush.bf16.msra.mxu0 0
        %831 = vmatpush.bf16.msra.mxu0 0
        %832 = vmatpush.bf16.msra.mxu0 0
        %833 = vmatpush.bf16.msra.mxu0 %v821
        %834 = vmatpush.bf16.msra.mxu0 %v820
        %835 = vmatmul.bf16.gmra.mxu0 %v825
        %v836 = vpop.f32.mrf.mxu0
        %v837 = vadd.f32 0.0, %v836
        %v838 = vpop.f32.mrf.mxu0
        %v839 = vadd.f32 0.0, %v838
        %840 = vdwg.mxu0
        %v841 = vadd.f32 %v805, %v837
        %v842 = vadd.f32 %v806, %v839
        %843 = vst [vmem:[#allocation3] sm:$0xff] %v841
        %844 = vst [vmem:[#allocation3 + $0x8] sm:$0xff] %v842
        %p845 = scmp.eq.s32.totalorder %s27, 3
        // Predicated region
        $region57: #{tpu_custom_call.1} parent=51 // pred_check
          %p846 = pneg %p845
        $region58: #{tpu_custom_call.1} parent=51 // pred_check_branch
          %848 = sbr.rel (%p846) target = $region60
        $region59: #{tpu_custom_call.1} parent=51 // pred_region
          %v849 = vld [vmem:[#allocation3] sm:$0xff]
          %v850 = vld [vmem:[#allocation3 + $0x8] sm:$0xff]
          %851 = vst [vmem:[%s396] sm:$0xff] %v849
          %852 = vst [vmem:[%s396 + $0x8] sm:$0xff] %v850
        $region60: #{tpu_custom_call.1} parent=51 // pred_fallthru
          _
        %s853 = sand.u32 %s245, 1
        %s854 = scalar_lea.sflag [#allocation5], %s853
        %s855 = sand.u32 %s245, 1
        %s856 = smul.addr %s855, 16
        %s857 = scalar_lea.vmem [#allocation4], %s856
        // Predicated region
        $region61: #{tpu_custom_call.1} parent=51 // pred_check
          %p858 = pneg %p255
        $region62: #{tpu_custom_call.1} parent=51 // pred_check_branch
          %860 = sbr.rel (%p858) target = $region64
        $region63: #{tpu_custom_call.1} parent=51 // pred_region
          %862 = vsyncadd %s854, 0
          %s863 = smul.addr %s26, 2
          %s864 = smul.addr %s863, 8
          %s865 = scalar_lea.hbm %s8, %s864
          %s866 = sshll.u32 %s857, 4
          %s867 = int_to_ptr.vmem [resolvable:$true] %s866
          %s868 = sshll.u32 %s865, 4
          %s869 = int_to_ptr.hbm [resolvable:$true] %s868
          %874 = dma.vmem_to_hbm [thread:$0]  %s867, 256, %s869, %s854, 128, 128, 8
        $region64: #{tpu_custom_call.1} parent=51 // pred_fallthru
          _
      $region52: #{tpu_custom_call.1} parent=5 // pred_fallthru
        _
      %p875 = scmp.le.s32.totalorder 2, %s17
      // Predicated region
      $region65: #{tpu_custom_call.1} parent=5 // pred_check
        %p876 = pneg %p875
      $region66: #{tpu_custom_call.1} parent=5 // pred_check_branch
        %878 = sbr.rel (%p876) target = $region68
      $region67: #{tpu_custom_call.1} parent=5 // pred_region
        %s879 = ssub.s32 %s17, 2
        // Predicated region
        $region69: #{tpu_custom_call.1} parent=67 // pred_check
          %p880 = pneg %p261
        $region70: #{tpu_custom_call.1} parent=67 // pred_check_branch
          %882 = sbr.rel (%p880) target = $region72
        $region71: #{tpu_custom_call.1} parent=67 // pred_region
          %s883 = sand.u32 %s246, 1
          %s884 = scalar_lea.sflag [#allocation5], %s883
          %s885 = sand.u32 %s246, 1
          %s886 = smul.addr %s885, 16
          %s887 = scalar_lea.vmem [#allocation4], %s886
          %889 = dma.done %s884, 256
        $region72: #{tpu_custom_call.1} parent=67 // pred_fallthru
          _
      $region68: #{tpu_custom_call.1} parent=5 // pred_fallthru
        _
    $region6: #{tpu_custom_call.1} parent=1 // loop_footer
      %s21 = sadd.s32 1, %s17
    $region7: #{tpu_custom_call.1} parent=1 // loop_footer_branch
      %16 = sbr.rel target = $region3
    $region8: #{tpu_custom_call.1} parent=1 // loop_exit
      _
    %890 = vsyncpa [#allocation5], 1
    %s891 = scalar_lea.sflag [#allocation5], 1
    %892 = vsyncpa %s891, 1

</llo_original>
